<compile_context>
chip_gen: v7x
topology: tpu7x:2x2x1
jax: 0.10.0
libtpu: 0.0.40
codegen_flags: <defaults>
</compile_context>

<pallas_src>
import functools

import jax
import jax.numpy as jnp
from jax import lax
from jax.experimental import pallas as pl
from jax.experimental.pallas import tpu as pltpu


def _round_up(x, m):
    return ((x + m - 1) // m) * m


def _vmem_capacity_bytes():
    try:
        return int(pltpu.get_tpu_info().vmem_capacity_bytes)
    except Exception:
        return 64 << 20  # conservative fallback (v7x per-TC capacity)


def _lpe_kernel(x_ref, w_ref, b_ref, o_ref, *, apply_sigmoid: bool):
    # x_ref: (tile_n, D) VMEM   -- streamed batch tile
    # w_ref: (1, D)      VMEM   -- resident lane-dense weight row
    # b_ref: (1,)        SMEM   -- scalar bias (f32)
    # o_ref: (1, tile_n) VMEM   -- lane-dense output row for this tile
    #
    # MXU contraction w @ x.T (rhs-transposed form, natively supported):
    # yields the lane-dense (1, tile_n) row directly.
    eta = lax.dot_general(
        w_ref[...], x_ref[...],
        dimension_numbers=(((1,), (1,)), ((), ())),
        preferred_element_type=jnp.float32)
    eta = eta + b_ref[0]                    # SMEM scalar bias
    if apply_sigmoid:
        eta = jax.nn.sigmoid(eta)           # EUP
    o_ref[...] = eta.astype(o_ref.dtype)


def logistic_propensity_forward(x, weight, bias, *, sigmoid=False, tile_n=None):
    """Forward of LogisticPropensityEstimator.

    x:      (N, D) float32 or bfloat16
    weight: (1, D)          (PyTorch nn.Linear(out=1, in=D) layout; lane-dense)
    bias:   (1,)
    returns (N, 1) in x.dtype
    """
    N, D = x.shape
    assert weight.shape == (1, D)
    assert bias.shape == (1,)

    d_lanes = _round_up(D, 128)              # lane padding of the feature axis
    itemsize = jnp.dtype(x.dtype).itemsize
    vmem_cap = _vmem_capacity_bytes()

    # --- tile selection ------------------------------------------------------
    # Size the tile purely by bytes derived from physical VMEM:
    #   128 MiB parts (v5e/v6e) -> 16 MiB tiles, 64 MiB parts (v7x) -> 8 MiB.
    # Double-buffered that is <= vmem_cap/4, leaving ample headroom.
    if tile_n is None:
        per_tile_bytes = max(4 << 20, min(16 << 20, vmem_cap // 8))
        tile_n = per_tile_bytes // (itemsize * d_lanes)
        tile_n = max(128, (tile_n // 128) * 128)
        # Guarantee >= 2 grid steps when N allows it (v7x megacore sharding).
        if N > 256:
            tile_n = min(tile_n, _round_up(pl.cdiv(N, 2), 128))
    else:
        tile_n = max(128, (int(tile_n) // 128) * 128)

    if N <= tile_n:
        # Single full-extent block: no padding, no partial block at all.
        tile_n = N
        num_tiles = 1
        n_out = N
    else:
        # No jnp.pad of x (would double HBM traffic): last block is partial;
        # its OOB rows only land in output lanes >= N, sliced off below.
        num_tiles = pl.cdiv(N, tile_n)
        n_out = num_tiles * tile_n

    # --- explicit VMEM budget (double-buffered x + weight + output rows) ------
    tn_lanes = _round_up(tile_n, 128)
    vmem_needed = (itemsize * 2 * tile_n * d_lanes   # x tiles (double-buffered)
                   + itemsize * 2 * 8 * d_lanes      # weight row (8-sublane pad)
                   + itemsize * 2 * 8 * tn_lanes)    # output rows
    vmem_limit = int(min(vmem_cap * 3 // 4,
                         max(vmem_needed + (4 << 20), 16 << 20)))

    weight = weight.astype(x.dtype)          # bf16 x -> bf16 MXU operands
    bias = bias.astype(jnp.float32)          # SMEM scalar stays f32

    kernel = functools.partial(_lpe_kernel, apply_sigmoid=sigmoid)

    cost = pl.CostEstimate(
        flops=2 * N * D,
        transcendentals=N if sigmoid else 0,
        bytes_accessed=itemsize * (N * D + D + N) + 4,
    )

    # TODO(synk): on v7x, sweep pipeline_mode=pl.Buffered(3) on the x BlockSpec
    # (short per-step compute window can expose DMA issue latency at 3.2 TB/s).
    out = pl.pallas_call(
        kernel,
        out_shape=jax.ShapeDtypeStruct((1, n_out), x.dtype),
        grid_spec=pltpu.PrefetchScalarGridSpec(
            num_scalar_prefetch=0,
            grid=(num_tiles,),
            in_specs=[
                pl.BlockSpec((tile_n, D), lambda i: (i, 0)),         # streamed x
                pl.BlockSpec((1, D), lambda i: (0, 0)),              # resident w
                pl.BlockSpec(memory_space=pltpu.MemorySpace.SMEM),   # bias
            ],
            out_specs=pl.BlockSpec((1, tile_n), lambda i: (0, i)),   # lane-dense
        ),
        compiler_params=pltpu.CompilerParams(
            dimension_semantics=("parallel",),
            vmem_limit_bytes=vmem_limit,
        ),
        cost_estimate=cost,
    )(x, weight, bias)

    # (1, n_out) lane-dense slab -> (N, 1) column, stripping any padded lanes.
    return out.reshape(n_out, 1)[:N]


if __name__ == "__main__":
    key = jax.random.PRNGKey(0)
    kx, kw, kb = jax.random.split(key, 3)

    N, D = 8, 32  # batch, input_dim
    x = jax.random.normal(kx, (N, D), dtype=jnp.float32)

    # Deterministic parameter init, exactly as the module's __init__:
    # nn.Linear(input_dim, 1) with weight and bias zeroed out.
    weight = jnp.zeros((1, D), dtype=jnp.float32)   # PyTorch layout (out, in)
    bias = jnp.zeros((1,), dtype=jnp.float32)

    # sigmoid=False path
    eta = jax.block_until_ready(
        logistic_propensity_forward(x, weight, bias, sigmoid=False))
    ref = x @ weight.T + bias
    assert eta.shape == (N, 1)
    assert jnp.allclose(eta, ref, atol=1e-6), "linear path mismatch"

    # sigmoid=True path
    eta_s = jax.block_until_ready(
        logistic_propensity_forward(x, weight, bias, sigmoid=True))
    assert jnp.allclose(eta_s, jax.nn.sigmoid(ref), atol=1e-6), "sigmoid path mismatch"

    # Non-zero parameters (exercise the actual math of the forward pass).
    w2 = jax.random.normal(kw, (1, D), dtype=jnp.float32) * 0.1
    b2 = jax.random.normal(kb, (1,), dtype=jnp.float32)
    eta2 = jax.block_until_ready(
        logistic_propensity_forward(x, w2, b2, sigmoid=True))
    ref2 = jax.nn.sigmoid(x @ w2.T + b2)
    assert jnp.allclose(eta2, ref2, atol=1e-5, rtol=1e-5), "nonzero-param mismatch"

    # Multi-tile ragged path (N not a multiple of the tile; no jnp.pad of x).
    N3 = 300
    x3 = jax.random.normal(kx, (N3, D), dtype=jnp.float32)
    eta3 = jax.block_until_ready(
        logistic_propensity_forward(x3, w2, b2, sigmoid=True, tile_n=128))
    ref3 = jax.nn.sigmoid(x3 @ w2.T + b2)
    assert eta3.shape == (N3, 1)
    assert jnp.allclose(eta3, ref3, atol=1e-5, rtol=1e-5), "tiled path mismatch"

    # Auto-tiled path on the same ragged N (exercises the >=2-step split).
    eta3b = jax.block_until_ready(
        logistic_propensity_forward(x3, w2, b2, sigmoid=True))
    assert jnp.allclose(eta3b, ref3, atol=1e-5, rtol=1e-5), "auto-tile mismatch"

    # bf16 input path (halves HBM traffic; MXU bf16 operands, f32 accumulate).
    x_bf = x3.astype(jnp.bfloat16)
    eta_bf = jax.block_until_ready(
        logistic_propensity_forward(x_bf, w2, b2, sigmoid=True, tile_n=128))
    ref_bf = jax.nn.sigmoid(x_bf.astype(jnp.float32) @ w2.T + b2)
    assert eta_bf.shape == (N3, 1)
    assert jnp.allclose(eta_bf.astype(jnp.float32), ref_bf, atol=2e-2), "bf16 mismatch"

    print("KERNEL_OK")
</pallas_src>

<mosaic_0001>
module attributes {stable_mosaic.version = 11 : i64} {
  func.func @_lpe_kernel(%arg0: i32, %arg1: memref<8x32xf32, #tpu.memory_space<vmem>>, %arg2: memref<1x32xf32, #tpu.memory_space<vmem>>, %arg3: memref<1xf32, #tpu.memory_space<smem>>, %arg4: memref<1x8xf32, #tpu.memory_space<vmem>>) attributes {dimension_semantics = [#tpu.dimension_semantics<parallel>], iteration_bounds = array<i64: 1>, scalar_prefetch = 0 : i64, scratch_operands = 0 : i64, tpu.core_type = #tpu.core_type<tc>, window_params = [{transform_indices = @transform_0, window_bounds = array<i64: 8, 32>}, {pipeline_mode = #tpu.pipeline_mode<synchronous>, transform_indices = @transform_1, window_bounds = array<i64: 1, 32>}, {transform_indices = @transform_2, window_bounds = array<i64: 1>}, {transform_indices = @transform_3, window_bounds = array<i64: 1, 8>}]} {
    %c0 = arith.constant 0 : index
    %c0_0 = arith.constant 0 : index
    %0 = vector.load %arg2[%c0, %c0_0] : memref<1x32xf32, #tpu.memory_space<vmem>>, vector<1x32xf32>
    %c0_1 = arith.constant 0 : index
    %c0_2 = arith.constant 0 : index
    %1 = vector.load %arg1[%c0_1, %c0_2] : memref<8x32xf32, #tpu.memory_space<vmem>>, vector<8x32xf32>
    %cst = arith.constant dense<0.000000e+00> : vector<1x8xf32>
    %2 = tpu.matmul %0, %1, %cst {dimension_numbers = #tpu.dot_dimension_numbers<[1], [1], [0], [0], [0, 0, 1, 0], [], []>} : vector<1x32xf32>, vector<8x32xf32>, vector<1x8xf32> -> vector<1x8xf32>
    %c0_3 = arith.constant 0 : index
    %3 = memref.load %arg3[%c0_3] : memref<1xf32, #tpu.memory_space<smem>>
    %4 = vector.broadcast %3 : f32 to vector<1x8xf32>
    %5 = arith.addf %2, %4 : vector<1x8xf32>
    %c0_4 = arith.constant 0 : index
    %c0_5 = arith.constant 0 : index
    %6 = vector.load %arg4[%c0_4, %c0_5] : memref<1x8xf32, #tpu.memory_space<vmem>>, vector<1x8xf32>
    tpu.vector_store %arg4[%c0_4, %c0_5], %5 {strides = array<i32>} : memref<1x8xf32, #tpu.memory_space<vmem>>, vector<1x8xf32>,
    return
  }
  func.func @transform_0(%arg0: i32) -> (i32, i32) {
    %c0_i32 = arith.constant 0 : i32
    %c0_i32_0 = arith.constant 0 : i32
    return %arg0, %c0_i32 : i32, i32
  }
  func.func @transform_1(%arg0: i32) -> (i32, i32) {
    %c0_i32 = arith.constant 0 : i32
    %c0_i32_0 = arith.constant 0 : i32
    %c0_i32_1 = arith.constant 0 : i32
    return %c0_i32, %c0_i32_0 : i32, i32
  }
  func.func @transform_2(%arg0: i32) -> i32 {
    %c0_i32 = arith.constant 0 : i32
    %c0_i32_0 = arith.constant 0 : i32
    return %c0_i32 : i32
  }
  func.func @transform_3(%arg0: i32) -> (i32, i32) {
    %c0_i32 = arith.constant 0 : i32
    %c0_i32_0 = arith.constant 0 : i32
    return %c0_i32, %arg0 : i32, i32
  }
}

</mosaic_0001>

<llo_original>
// kernel: tpu_custom_call.1
$region0: #{tpu_custom_call.1}
  #allocation0 [shape = 'u32[]', space=smem, size = 0x4, offset = 0x4, fixed_abs, tag = 'smem constant byte address 0x4 - core index']
  #allocation1 [shape = 'u32[144,128]{1,0:T(1,128)}', space=vmem, size = 0x12000, scoped, tag = 'internal scratch']
  #allocation2 [shape = 'f32[1]{0:T(128)S(6)}', space=smem, size = 0x200, scoped, tag = 'scoped memory for tpu_custom_call.1']
  %s0 = inlined_call_operand.hbm [shape: f32[8,32], index: 0, kind: input, shape index: {}]
  %s1 = inlined_call_operand.vmem [shape: f32[1,32], index: 1, kind: input, shape index: {}]
  %s2 = inlined_call_operand.<no memory space> [shape: f32[1], index: 2, kind: input, shape index: {}]
  %s3 = inlined_call_operand.hbm [shape: f32[1,8], index: 3, kind: output, shape index: {}]
  %s4 = sld [smem:[#allocation0]]
  $region26: #{tpu_custom_call.1} parent=0
    _
  %s6 = ssub.s32 1, %s4
  %s7 = scalar_select 0, %s6, %s4
  %8 = sst [smem:[#allocation2]] %s2
  $region1: #{tpu_custom_call.1} parent=0
    #allocation3 [shape = 'u8[4096]{0}', space=vmem, size = 0x1000, scoped, tag = 'input window, operand 0, single buffered']
    #allocation4 [shape = 's32[1]{0}', space=sflag, size = 0x4, scoped, tag = 'scoped memory for tpu_custom_call.1']
    #allocation5 [shape = 's32[1]{0}', space=sflag, size = 0x4, scoped, tag = 'scoped memory for tpu_custom_call.1']
    #allocation6 [shape = 'u8[512]{0}', space=vmem, size = 0x400, scoped, tag = 'output window, operand 0, single buffered']
    %9 = vsyncpa [#allocation4], 0
    %10 = vsyncpa [#allocation5], 0
    // Predicated region
    $region2: #{tpu_custom_call.1} parent=1 // pred_check
      _
    $region3: #{tpu_custom_call.1} parent=1 // pred_check_branch
      %12 = sbr.rel (0) target = $region5
    $region4: #{tpu_custom_call.1} parent=1 // pred_region
      %s14 = ssub.s32 128, 128
      %15 = vsyncadd [#allocation4], %s14
      %s17 = sshll.u32 [#allocation3], 4
      %s18 = int_to_ptr.vmem [resolvable:$true] %s17
      %20 = dma.hbm_to_vmem [thread:$0]  %s0, 128, %s18, [#allocation4]
    $region5: #{tpu_custom_call.1} parent=1 // pred_fallthru
      _
    // Predicated region
    $region6: #{tpu_custom_call.1} parent=1 // pred_check
      _
    $region7: #{tpu_custom_call.1} parent=1 // pred_check_branch
      %22 = sbr.rel (0) target = $region9
    $region8: #{tpu_custom_call.1} parent=1 // pred_region
      _
    $region9: #{tpu_custom_call.1} parent=1 // pred_fallthru
      _
    // Predicated region
    $region10: #{tpu_custom_call.1} parent=1 // pred_check
      _
    $region11: #{tpu_custom_call.1} parent=1 // pred_check_branch
      %24 = sbr.rel (0) target = $region13
    $region12: #{tpu_custom_call.1} parent=1 // pred_region
      _
    $region13: #{tpu_custom_call.1} parent=1 // pred_fallthru
      _
    // Predicated region
    $region14: #{tpu_custom_call.1} parent=1 // pred_check
      _
    $region15: #{tpu_custom_call.1} parent=1 // pred_check_branch
      %26 = sbr.rel (0) target = $region17
    $region16: #{tpu_custom_call.1} parent=1 // pred_region
      %27 = dma.done [#allocation4], 128
    $region17: #{tpu_custom_call.1} parent=1 // pred_fallthru
      _
    %v28 = vld [vmem:[%s1] sm:$0x1]
    %v29 = vld [vmem:[#allocation3] sm:$0xff]
    %s30 = sld [smem:[#allocation2]]
    %v31 = vstv %s30
    %vm32 = vcmask 261120
    %v34 = vsel %vm32, %v28, 0
    %v37 = vsel %vm32, %v29, 0
    %39 = vmatprep.subr.mxu0 0.0
    %40 = vmatpush1.xpose.msra.mxu0 %v37
    %41 = vmatprep.subr.mxu0 0.0
    %42 = vmatpush1.xpose.msra.mxu0 0.0
    %43 = vmatprep.subr.mxu0 0.0
    %44 = vmatpush1.xpose.msra.mxu0 0.0
    %45 = vmatprep.subr.mxu0 0.0
    %46 = vmatpush1.xpose.msra.mxu0 0.0
    %47 = vmatprep.subr.mxu0 0.0
    %48 = vmatpush1.xpose.msra.mxu0 0.0
    %49 = vmatprep.subr.mxu0 0.0
    %50 = vmatpush1.xpose.msra.mxu0 0.0
    %51 = vmatprep.subr.mxu0 0.0
    %52 = vmatpush1.xpose.msra.mxu0 0.0
    %53 = vmatprep.subr.mxu0 0.0
    %54 = vmatpush1.xpose.msra.mxu0 0.0
    %55 = vmatprep.subr.mxu0 0.0
    %56 = vmatpush1.xpose.msra.mxu0 0.0
    %57 = vmatprep.subr.mxu0 0.0
    %58 = vmatpush1.xpose.msra.mxu0 0.0
    %59 = vmatprep.subr.mxu0 0.0
    %60 = vmatpush1.xpose.msra.mxu0 0.0
    %61 = vmatprep.subr.mxu0 0.0
    %62 = vmatpush1.xpose.msra.mxu0 0.0
    %63 = vmatprep.subr.mxu0 0.0
    %64 = vmatpush1.xpose.msra.mxu0 0.0
    %65 = vmatprep.subr.mxu0 0.0
    %66 = vmatpush1.xpose.msra.mxu0 0.0
    %67 = vmatprep.subr.mxu0 0.0
    %68 = vmatpush1.xpose.msra.mxu0 0.0
    %69 = vmatprep.subr.mxu0 0.0
    %70 = vmatpush1.xpose.msra.mxu0 0.0
    %71 = vmatprep.subr.mxu0 0.0
    %72 = vmatpush1.xpose.msra.mxu0 0.0
    %73 = vmatprep.subr.mxu0 0.0
    %74 = vmatpush1.xpose.msra.mxu0 0.0
    %75 = vmatprep.subr.mxu0 0.0
    %76 = vmatpush1.xpose.msra.mxu0 0.0
    %77 = vmatprep.subr.mxu0 0.0
    %78 = vmatpush1.xpose.msra.mxu0 0.0
    %79 = vmatprep.subr.mxu0 0.0
    %80 = vmatpush1.xpose.msra.mxu0 0.0
    %81 = vmatprep.subr.mxu0 0.0
    %82 = vmatpush1.xpose.msra.mxu0 0.0
    %83 = vmatprep.subr.mxu0 0.0
    %84 = vmatpush1.xpose.msra.mxu0 0.0
    %85 = vmatprep.subr.mxu0 0.0
    %86 = vmatpush1.xpose.msra.mxu0 0.0
    %87 = vmatprep.subr.mxu0 0.0
    %88 = vmatpush1.xpose.msra.mxu0 0.0
    %89 = vmatprep.subr.mxu0 0.0
    %90 = vmatpush1.xpose.msra.mxu0 0.0
    %91 = vmatprep.subr.mxu0 0.0
    %92 = vmatpush1.xpose.msra.mxu0 0.0
    %93 = vmatprep.subr.mxu0 0.0
    %94 = vmatpush1.xpose.msra.mxu0 0.0
    %95 = vmatprep.subr.mxu0 0.0
    %96 = vmatpush1.xpose.msra.mxu0 0.0
    %97 = vmatprep.subr.mxu0 0.0
    %98 = vmatpush1.xpose.msra.mxu0 0.0
    %99 = vmatprep.subr.mxu0 0.0
    %100 = vmatpush1.xpose.msra.mxu0 0.0
    %101 = vmatprep.subr.mxu0 0.0
    %102 = vmatpush1.xpose.msra.mxu0 0.0
    %103 = vmatprep.mubr.f32.mxu0 0.0
    %104 = vmatmul.mubr.f32.gmra.mrb[0].mxu0 %v34
    %v105 = vpop.f32.mrb[0].mxu0
    %v106 = vadd.f32 %v31, %v105
    %v107 = vpop.f32.mrb[0].mxu0
    %108 = vdwg.mxu0
    %vm109 = vcmask 57344
    %110 = vst.msk [vmem:[#allocation6] sm:$0x1] %vm109, %v106
    // Predicated region
    $region18: #{tpu_custom_call.1} parent=1 // pred_check
      _
    $region19: #{tpu_custom_call.1} parent=1 // pred_check_branch
      %112 = sbr.rel (0) target = $region21
    $region20: #{tpu_custom_call.1} parent=1 // pred_region
      %s114 = ssub.s32 16, 16
      %115 = vsyncadd [#allocation5], %s114
      %s117 = sshll.u32 [#allocation6], 4
      %s118 = int_to_ptr.vmem [resolvable:$true] %s117
      %120 = dma.vmem_to_hbm [thread:$0]  %s118, 16, %s3, [#allocation5]
    $region21: #{tpu_custom_call.1} parent=1 // pred_fallthru
      _
    // Predicated region
    $region22: #{tpu_custom_call.1} parent=1 // pred_check
      _
    $region23: #{tpu_custom_call.1} parent=1 // pred_check_branch
      %122 = sbr.rel (0) target = $region25
    $region24: #{tpu_custom_call.1} parent=1 // pred_region
      %123 = dma.done [#allocation5], 16
    $region25: #{tpu_custom_call.1} parent=1 // pred_fallthru
      _
    %124 = vsyncpa [#allocation4], 1
    %125 = vsyncpa [#allocation5], 1

</llo_original>
